<compile_context>
chip_gen: v5e
topology: v5e:2x2
jax: 0.10.0
libtpu: 0.0.40
codegen_flags: <defaults>
</compile_context>

<pallas_src>
import jax
import jax.numpy as jnp
from jax.experimental import pallas as pl
from jax.experimental.pallas import tpu as pltpu

_LANES = 128
_SUBLANES = 8


def _round_up(x, m):
    return ((x + m - 1) // m) * m


def lstm_kernel(idx_ref, emb_ref, w_hh_ref, w_out_ref, b_out_ref, out_ref):
    """Whole TextLSTM forward (recurrence + final Linear) in one invocation.

    idx_ref   : (seq, Bp, 1) int32    token indices, time-major, batch-padded
    emb_ref   : (Cp, 4H)     float32  W_ih^T + (b_ih + b_hh), g-cols pre-x2
    w_hh_ref  : (H, 4H)      bfloat16 W_hh^T, g-cols pre-x2
    w_out_ref : (H, L)       float32  W_out^T zero-padded to L=128 lanes
    b_out_ref : (1, L)       float32  b zero-padded to L lanes
    out_ref   : (Bp, L)      float32
    """
    seq, b_pad, _ = idx_ref.shape
    c_pad = emb_ref.shape[0]
    n_hidden = w_hh_ref.shape[0]

    emb = emb_ref[...]      # loaded once, reused every step
    w_hh = w_hh_ref[...]
    # Hoisted out of the loop (JAX does not CSE broadcast_in_dim / iota).
    class_iota = jax.lax.broadcasted_iota(jnp.int32, (b_pad, c_pad), 1)

    def step(t, carry):
        h, c = carry
        # Embedding "gather" as an exact one-hot matmul (independent of h,
        # so it stays off the serial critical path).
        idx_col = idx_ref[t]                                    # (Bp, 1) int32
        onehot = (class_iota == idx_col).astype(jnp.float32)    # (Bp, Cp)
        x_t = jnp.dot(onehot, emb, preferred_element_type=jnp.float32)  # (Bp,4H)

        # Recurrent matmul in bf16 operands, f32 accumulation (critical path).
        gates = x_t + jnp.dot(h.astype(jnp.bfloat16), w_hh,
                              preferred_element_type=jnp.float32)       # (Bp,4H)

        # One full-vreg sigmoid; PyTorch gate order i, f, g, o.
        sig = jax.nn.sigmoid(gates)
        i_g = sig[:, 0 * n_hidden:1 * n_hidden]
        f_g = sig[:, 1 * n_hidden:2 * n_hidden]
        # g columns were pre-scaled by 2 -> tanh(g) = 2*sigmoid(2g) - 1.
        g_g = 2.0 * sig[:, 2 * n_hidden:3 * n_hidden] - 1.0
        o_g = sig[:, 3 * n_hidden:4 * n_hidden]

        c_new = f_g * c + i_g * g_g
        h_new = o_g * jnp.tanh(c_new)
        return (h_new, c_new)

    h0 = jnp.zeros((b_pad, n_hidden), jnp.float32)
    c0 = jnp.zeros((b_pad, n_hidden), jnp.float32)
    h_last, _ = jax.lax.fori_loop(0, seq, step, (h0, c0), unroll=True)

    # model = h_T @ W_out^T + b  (lane-padded -> unmasked full-lane store).
    out_ref[...] = (
        jnp.dot(h_last, w_out_ref[...], preferred_element_type=jnp.float32)
        + b_out_ref[...])


def prepare_params(params):
    """One-time parameter preprocessing; call OUTSIDE the jitted forward."""
    w_ih, w_hh, b_ih, b_hh, w_out, b_out = params
    four_h, n_class = w_ih.shape
    n_hidden = four_h // 4

    # tanh-via-sigmoid trick: double the g-gate (block 2) pre-activations.
    scale = jnp.ones((four_h,), jnp.float32)
    scale = scale.at[2 * n_hidden:3 * n_hidden].set(2.0)

    emb = (w_ih.T + (b_ih + b_hh)[None, :]) * scale[None, :]        # (C, 4H)
    c_pad = _round_up(n_class, _SUBLANES)
    emb = jnp.pad(emb, ((0, c_pad - n_class), (0, 0)))              # (Cp, 4H)

    w_hh_t = (w_hh.T * scale[None, :]).astype(jnp.bfloat16)         # (H, 4H)

    l_pad = _round_up(n_class, _LANES)
    w_out_t = jnp.pad(w_out.T, ((0, 0), (0, l_pad - n_class)))      # (H, L)
    b_out_p = jnp.pad(b_out, (0, l_pad - n_class)).reshape(1, l_pad)
    return emb, w_hh_t, w_out_t, b_out_p


def text_lstm_forward(idx, prepped, n_class):
    """idx: (batch, seq) int32 token ids (X = one_hot(idx)).

    Returns (batch, n_class) float32, matching TextLSTM.forward(one_hot(idx)).
    """
    emb, w_hh_t, w_out_t, b_out_p = prepped
    batch, seq = idx.shape
    b_pad = _round_up(batch, _SUBLANES)
    l_pad = b_out_p.shape[1]

    # Time-major layout + sublane-aligned batch padding (tiny int ops).
    idx_tm = jnp.transpose(idx).astype(jnp.int32)                   # (seq, B)
    if b_pad != batch:
        idx_tm = jnp.pad(idx_tm, ((0, 0), (0, b_pad - batch)))      # pads read row 0
    idx_tm = idx_tm.reshape(seq, b_pad, 1)

    vmem = pl.BlockSpec(memory_space=pltpu.MemorySpace.VMEM)        # full-array blocks
    out_padded = pl.pallas_call(
        lstm_kernel,
        out_shape=jax.ShapeDtypeStruct((b_pad, l_pad), jnp.float32),
        in_specs=[vmem, vmem, vmem, vmem, vmem],
        out_specs=vmem,
    )(idx_tm, emb, w_hh_t, w_out_t, b_out_p)

    return out_padded[:batch, :n_class]


def reference_forward(idx, params):
    """Pure-JAX f32 reference with PyTorch TextLSTM semantics (HIGHEST precision)."""
    w_ih, w_hh, b_ih, b_hh, w_out, b_out = params
    n_hidden = w_hh.shape[1]
    n_class = w_ih.shape[1]
    hi = jax.lax.Precision.HIGHEST

    X = jax.nn.one_hot(idx, n_class, dtype=jnp.float32)     # (batch, seq, C)
    x_tm = jnp.transpose(X, (1, 0, 2))                      # (seq, batch, C)

    def step(carry, x_t):
        h, c = carry
        gates = (jnp.dot(x_t, w_ih.T, precision=hi)
                 + jnp.dot(h, w_hh.T, precision=hi) + b_ih + b_hh)
        i = jax.nn.sigmoid(gates[:, 0 * n_hidden:1 * n_hidden])
        f = jax.nn.sigmoid(gates[:, 1 * n_hidden:2 * n_hidden])
        g = jnp.tanh(gates[:, 2 * n_hidden:3 * n_hidden])
        o = jax.nn.sigmoid(gates[:, 3 * n_hidden:4 * n_hidden])
        c = f * c + i * g
        h = o * jnp.tanh(c)
        return (h, c), None

    h0 = jnp.zeros((idx.shape[0], n_hidden), jnp.float32)
    (h, _), _ = jax.lax.scan(step, (h0, h0), x_tm)
    return jnp.dot(h, w_out.T, precision=hi) + b_out


def init_params(key, n_class, n_hidden):
    """Deterministic synthetic params matching nn.LSTM / nn.Linear shapes."""
    ks = jax.random.split(key, 5)
    bound = 1.0 / jnp.sqrt(n_hidden)
    u = lambda k, shape: jax.random.uniform(k, shape, jnp.float32, -bound, bound)
    w_ih = u(ks[0], (4 * n_hidden, n_class))     # lstm.weight_ih_l0
    w_hh = u(ks[1], (4 * n_hidden, n_hidden))    # lstm.weight_hh_l0
    b_ih = u(ks[2], (4 * n_hidden,))             # lstm.bias_ih_l0
    b_hh = u(ks[3], (4 * n_hidden,))             # lstm.bias_hh_l0
    w_out = u(ks[4], (n_class, n_hidden))        # W.weight (Linear, no bias)
    b_out = jnp.ones((n_class,), jnp.float32)    # self.b = ones([n_class])
    return (w_ih, w_hh, b_ih, b_hh, w_out, b_out)


if __name__ == "__main__":
    n_class, n_hidden = 26, 32     # alphabet one-hot, 4H = 128 lanes
    batch, seq = 4, 8

    key = jax.random.PRNGKey(0)
    k_param, k_x = jax.random.split(key)
    params = init_params(k_param, n_class, n_hidden)

    # Token indices; the PyTorch module's X is exactly one_hot(idx).
    idx = jax.random.randint(k_x, (batch, seq), 0, n_class, dtype=jnp.int32)

    prepped = prepare_params(params)           # one-time param prep (outside jit)
    fwd = jax.jit(lambda ids: text_lstm_forward(ids, prepped, n_class))
    out = jax.block_until_ready(fwd(idx))

    ref = reference_forward(idx, params)
    assert out.shape == (batch, n_class)
    # bf16 MXU operands in the recurrence -> ~1e-3 abs error vs the f32 reference.
    assert jnp.allclose(out, ref, atol=2e-2, rtol=2e-2), "mismatch vs reference"

    print("KERNEL_OK")
</pallas_src>

<mosaic_0001>
module attributes {stable_mosaic.version = 11 : i64} {
  func.func @lstm_kernel(%arg0: memref<8x8x1xi32, #tpu.memory_space<vmem>>, %arg1: memref<32x128xf32, #tpu.memory_space<vmem>>, %arg2: memref<32x128xbf16, #tpu.memory_space<vmem>>, %arg3: memref<32x128xf32, #tpu.memory_space<vmem>>, %arg4: memref<1x128xf32, #tpu.memory_space<vmem>>, %arg5: memref<8x128xf32, #tpu.memory_space<vmem>>) attributes {dimension_semantics = [], scalar_prefetch = 0 : i64, scratch_operands = 0 : i64, tpu.core_type = #tpu.core_type<tc>} {
    %c0 = arith.constant 0 : index
    %c0_0 = arith.constant 0 : index
    %0 = vector.load %arg1[%c0, %c0_0] : memref<32x128xf32, #tpu.memory_space<vmem>>, vector<32x128xf32>
    %c0_1 = arith.constant 0 : index
    %c0_2 = arith.constant 0 : index
    %1 = vector.load %arg2[%c0_1, %c0_2] : memref<32x128xbf16, #tpu.memory_space<vmem>>, vector<32x128xbf16>
    %2 = tpu.iota {dimensions = array<i32: 1>} : vector<8x32xi32>
    %cst = arith.constant 0.000000e+00 : f32
    %3 = vector.broadcast %cst : f32 to vector<8x32xf32>
    %cst_3 = arith.constant 0.000000e+00 : f32
    %4 = vector.broadcast %cst_3 : f32 to vector<8x32xf32>
    %c0_i32 = arith.constant 0 : i32
    %5 = arith.index_cast %c0_i32 : i32 to index
    %c0_4 = arith.constant 0 : index
    %c0_5 = arith.constant 0 : index
    %6 = vector.load %arg0[%5, %c0_4, %c0_5] : memref<8x8x1xi32, #tpu.memory_space<vmem>>, vector<1x8x1xi32>
    %7 = vector.shape_cast %6 : vector<1x8x1xi32> to vector<8x1xi32>
    %8 = vector.broadcast %7 : vector<8x1xi32> to vector<8x32xi32>
    %9 = arith.cmpi eq, %2, %8 : vector<8x32xi32>
    %10 = arith.extui %9 : vector<8x32xi1> to vector<8x32xi32>
    %11 = arith.sitofp %10 : vector<8x32xi32> to vector<8x32xf32>
    %cst_6 = arith.constant dense<0.000000e+00> : vector<8x128xf32>
    %12 = tpu.matmul %11, %0, %cst_6 {dimension_numbers = #tpu.dot_dimension_numbers<[1], [0], [0], [1], [0, 0, 1, 1], [], []>} : vector<8x32xf32>, vector<32x128xf32>, vector<8x128xf32> -> vector<8x128xf32>
    %13 = arith.truncf %3 : vector<8x32xf32> to vector<8x32xbf16>
    %cst_7 = arith.constant dense<0.000000e+00> : vector<8x128xf32>
    %14 = tpu.matmul %13, %1, %cst_7 {dimension_numbers = #tpu.dot_dimension_numbers<[1], [0], [0], [1], [0, 0, 1, 1], [], []>} : vector<8x32xbf16>, vector<32x128xbf16>, vector<8x128xf32> -> vector<8x128xf32>
    %15 = arith.addf %12, %14 : vector<8x128xf32>
    %16 = arith.negf %15 : vector<8x128xf32>
    %17 = math.exp %16 : vector<8x128xf32>
    %cst_8 = arith.constant 1.000000e+00 : f32
    %18 = vector.broadcast %cst_8 : f32 to vector<8x128xf32>
    %19 = arith.addf %18, %17 : vector<8x128xf32>
    %20 = arith.divf %18, %19 : vector<8x128xf32>
    %21 = vector.extract_strided_slice %20 {offsets = [0, 0], sizes = [8, 32], strides = [1, 1]} : vector<8x128xf32> to vector<8x32xf32>
    %22 = vector.extract_strided_slice %20 {offsets = [0, 32], sizes = [8, 32], strides = [1, 1]} : vector<8x128xf32> to vector<8x32xf32>
    %23 = vector.extract_strided_slice %20 {offsets = [0, 64], sizes = [8, 32], strides = [1, 1]} : vector<8x128xf32> to vector<8x32xf32>
    %cst_9 = arith.constant 2.000000e+00 : f32
    %24 = vector.broadcast %cst_9 : f32 to vector<8x32xf32>
    %25 = arith.mulf %24, %23 : vector<8x32xf32>
    %cst_10 = arith.constant 1.000000e+00 : f32
    %26 = vector.broadcast %cst_10 : f32 to vector<8x32xf32>
    %27 = arith.subf %25, %26 : vector<8x32xf32>
    %28 = vector.extract_strided_slice %20 {offsets = [0, 96], sizes = [8, 32], strides = [1, 1]} : vector<8x128xf32> to vector<8x32xf32>
    %29 = arith.mulf %22, %4 : vector<8x32xf32>
    %30 = arith.mulf %21, %27 : vector<8x32xf32>
    %31 = arith.addf %29, %30 : vector<8x32xf32>
    %32 = math.tanh %31 : vector<8x32xf32>
    %33 = arith.mulf %28, %32 : vector<8x32xf32>
    %c1_i32 = arith.constant 1 : i32
    %34 = arith.index_cast %c1_i32 : i32 to index
    %c0_11 = arith.constant 0 : index
    %c0_12 = arith.constant 0 : index
    %35 = vector.load %arg0[%34, %c0_11, %c0_12] : memref<8x8x1xi32, #tpu.memory_space<vmem>>, vector<1x8x1xi32>
    %36 = vector.shape_cast %35 : vector<1x8x1xi32> to vector<8x1xi32>
    %37 = vector.broadcast %36 : vector<8x1xi32> to vector<8x32xi32>
    %38 = arith.cmpi eq, %2, %37 : vector<8x32xi32>
    %39 = arith.extui %38 : vector<8x32xi1> to vector<8x32xi32>
    %40 = arith.sitofp %39 : vector<8x32xi32> to vector<8x32xf32>
    %cst_13 = arith.constant dense<0.000000e+00> : vector<8x128xf32>
    %41 = tpu.matmul %40, %0, %cst_13 {dimension_numbers = #tpu.dot_dimension_numbers<[1], [0], [0], [1], [0, 0, 1, 1], [], []>} : vector<8x32xf32>, vector<32x128xf32>, vector<8x128xf32> -> vector<8x128xf32>
    %42 = arith.truncf %33 : vector<8x32xf32> to vector<8x32xbf16>
    %cst_14 = arith.constant dense<0.000000e+00> : vector<8x128xf32>
    %43 = tpu.matmul %42, %1, %cst_14 {dimension_numbers = #tpu.dot_dimension_numbers<[1], [0], [0], [1], [0, 0, 1, 1], [], []>} : vector<8x32xbf16>, vector<32x128xbf16>, vector<8x128xf32> -> vector<8x128xf32>
    %44 = arith.addf %41, %43 : vector<8x128xf32>
    %45 = arith.negf %44 : vector<8x128xf32>
    %46 = math.exp %45 : vector<8x128xf32>
    %cst_15 = arith.constant 1.000000e+00 : f32
    %47 = vector.broadcast %cst_15 : f32 to vector<8x128xf32>
    %48 = arith.addf %47, %46 : vector<8x128xf32>
    %49 = arith.divf %47, %48 : vector<8x128xf32>
    %50 = vector.extract_strided_slice %49 {offsets = [0, 0], sizes = [8, 32], strides = [1, 1]} : vector<8x128xf32> to vector<8x32xf32>
    %51 = vector.extract_strided_slice %49 {offsets = [0, 32], sizes = [8, 32], strides = [1, 1]} : vector<8x128xf32> to vector<8x32xf32>
    %52 = vector.extract_strided_slice %49 {offsets = [0, 64], sizes = [8, 32], strides = [1, 1]} : vector<8x128xf32> to vector<8x32xf32>
    %cst_16 = arith.constant 2.000000e+00 : f32
    %53 = vector.broadcast %cst_16 : f32 to vector<8x32xf32>
    %54 = arith.mulf %53, %52 : vector<8x32xf32>
    %cst_17 = arith.constant 1.000000e+00 : f32
    %55 = vector.broadcast %cst_17 : f32 to vector<8x32xf32>
    %56 = arith.subf %54, %55 : vector<8x32xf32>
    %57 = vector.extract_strided_slice %49 {offsets = [0, 96], sizes = [8, 32], strides = [1, 1]} : vector<8x128xf32> to vector<8x32xf32>
    %58 = arith.mulf %51, %31 : vector<8x32xf32>
    %59 = arith.mulf %50, %56 : vector<8x32xf32>
    %60 = arith.addf %58, %59 : vector<8x32xf32>
    %61 = math.tanh %60 : vector<8x32xf32>
    %62 = arith.mulf %57, %61 : vector<8x32xf32>
    %c2_i32 = arith.constant 2 : i32
    %63 = arith.index_cast %c2_i32 : i32 to index
    %c0_18 = arith.constant 0 : index
    %c0_19 = arith.constant 0 : index
    %64 = vector.load %arg0[%63, %c0_18, %c0_19] : memref<8x8x1xi32, #tpu.memory_space<vmem>>, vector<1x8x1xi32>
    %65 = vector.shape_cast %64 : vector<1x8x1xi32> to vector<8x1xi32>
    %66 = vector.broadcast %65 : vector<8x1xi32> to vector<8x32xi32>
    %67 = arith.cmpi eq, %2, %66 : vector<8x32xi32>
    %68 = arith.extui %67 : vector<8x32xi1> to vector<8x32xi32>
    %69 = arith.sitofp %68 : vector<8x32xi32> to vector<8x32xf32>
    %cst_20 = arith.constant dense<0.000000e+00> : vector<8x128xf32>
    %70 = tpu.matmul %69, %0, %cst_20 {dimension_numbers = #tpu.dot_dimension_numbers<[1], [0], [0], [1], [0, 0, 1, 1], [], []>} : vector<8x32xf32>, vector<32x128xf32>, vector<8x128xf32> -> vector<8x128xf32>
    %71 = arith.truncf %62 : vector<8x32xf32> to vector<8x32xbf16>
    %cst_21 = arith.constant dense<0.000000e+00> : vector<8x128xf32>
    %72 = tpu.matmul %71, %1, %cst_21 {dimension_numbers = #tpu.dot_dimension_numbers<[1], [0], [0], [1], [0, 0, 1, 1], [], []>} : vector<8x32xbf16>, vector<32x128xbf16>, vector<8x128xf32> -> vector<8x128xf32>
    %73 = arith.addf %70, %72 : vector<8x128xf32>
    %74 = arith.negf %73 : vector<8x128xf32>
    %75 = math.exp %74 : vector<8x128xf32>
    %cst_22 = arith.constant 1.000000e+00 : f32
    %76 = vector.broadcast %cst_22 : f32 to vector<8x128xf32>
    %77 = arith.addf %76, %75 : vector<8x128xf32>
    %78 = arith.divf %76, %77 : vector<8x128xf32>
    %79 = vector.extract_strided_slice %78 {offsets = [0, 0], sizes = [8, 32], strides = [1, 1]} : vector<8x128xf32> to vector<8x32xf32>
    %80 = vector.extract_strided_slice %78 {offsets = [0, 32], sizes = [8, 32], strides = [1, 1]} : vector<8x128xf32> to vector<8x32xf32>
    %81 = vector.extract_strided_slice %78 {offsets = [0, 64], sizes = [8, 32], strides = [1, 1]} : vector<8x128xf32> to vector<8x32xf32>
    %cst_23 = arith.constant 2.000000e+00 : f32
    %82 = vector.broadcast %cst_23 : f32 to vector<8x32xf32>
    %83 = arith.mulf %82, %81 : vector<8x32xf32>
    %cst_24 = arith.constant 1.000000e+00 : f32
    %84 = vector.broadcast %cst_24 : f32 to vector<8x32xf32>
    %85 = arith.subf %83, %84 : vector<8x32xf32>
    %86 = vector.extract_strided_slice %78 {offsets = [0, 96], sizes = [8, 32], strides = [1, 1]} : vector<8x128xf32> to vector<8x32xf32>
    %87 = arith.mulf %80, %60 : vector<8x32xf32>
    %88 = arith.mulf %79, %85 : vector<8x32xf32>
    %89 = arith.addf %87, %88 : vector<8x32xf32>
    %90 = math.tanh %89 : vector<8x32xf32>
    %91 = arith.mulf %86, %90 : vector<8x32xf32>
    %c3_i32 = arith.constant 3 : i32
    %92 = arith.index_cast %c3_i32 : i32 to index
    %c0_25 = arith.constant 0 : index
    %c0_26 = arith.constant 0 : index
    %93 = vector.load %arg0[%92, %c0_25, %c0_26] : memref<8x8x1xi32, #tpu.memory_space<vmem>>, vector<1x8x1xi32>
    %94 = vector.shape_cast %93 : vector<1x8x1xi32> to vector<8x1xi32>
    %95 = vector.broadcast %94 : vector<8x1xi32> to vector<8x32xi32>
    %96 = arith.cmpi eq, %2, %95 : vector<8x32xi32>
    %97 = arith.extui %96 : vector<8x32xi1> to vector<8x32xi32>
    %98 = arith.sitofp %97 : vector<8x32xi32> to vector<8x32xf32>
    %cst_27 = arith.constant dense<0.000000e+00> : vector<8x128xf32>
    %99 = tpu.matmul %98, %0, %cst_27 {dimension_numbers = #tpu.dot_dimension_numbers<[1], [0], [0], [1], [0, 0, 1, 1], [], []>} : vector<8x32xf32>, vector<32x128xf32>, vector<8x128xf32> -> vector<8x128xf32>
    %100 = arith.truncf %91 : vector<8x32xf32> to vector<8x32xbf16>
    %cst_28 = arith.constant dense<0.000000e+00> : vector<8x128xf32>
    %101 = tpu.matmul %100, %1, %cst_28 {dimension_numbers = #tpu.dot_dimension_numbers<[1], [0], [0], [1], [0, 0, 1, 1], [], []>} : vector<8x32xbf16>, vector<32x128xbf16>, vector<8x128xf32> -> vector<8x128xf32>
    %102 = arith.addf %99, %101 : vector<8x128xf32>
    %103 = arith.negf %102 : vector<8x128xf32>
    %104 = math.exp %103 : vector<8x128xf32>
    %cst_29 = arith.constant 1.000000e+00 : f32
    %105 = vector.broadcast %cst_29 : f32 to vector<8x128xf32>
    %106 = arith.addf %105, %104 : vector<8x128xf32>
    %107 = arith.divf %105, %106 : vector<8x128xf32>
    %108 = vector.extract_strided_slice %107 {offsets = [0, 0], sizes = [8, 32], strides = [1, 1]} : vector<8x128xf32> to vector<8x32xf32>
    %109 = vector.extract_strided_slice %107 {offsets = [0, 32], sizes = [8, 32], strides = [1, 1]} : vector<8x128xf32> to vector<8x32xf32>
    %110 = vector.extract_strided_slice %107 {offsets = [0, 64], sizes = [8, 32], strides = [1, 1]} : vector<8x128xf32> to vector<8x32xf32>
    %cst_30 = arith.constant 2.000000e+00 : f32
    %111 = vector.broadcast %cst_30 : f32 to vector<8x32xf32>
    %112 = arith.mulf %111, %110 : vector<8x32xf32>
    %cst_31 = arith.constant 1.000000e+00 : f32
    %113 = vector.broadcast %cst_31 : f32 to vector<8x32xf32>
    %114 = arith.subf %112, %113 : vector<8x32xf32>
    %115 = vector.extract_strided_slice %107 {offsets = [0, 96], sizes = [8, 32], strides = [1, 1]} : vector<8x128xf32> to vector<8x32xf32>
    %116 = arith.mulf %109, %89 : vector<8x32xf32>
    %117 = arith.mulf %108, %114 : vector<8x32xf32>
    %118 = arith.addf %116, %117 : vector<8x32xf32>
    %119 = math.tanh %118 : vector<8x32xf32>
    %120 = arith.mulf %115, %119 : vector<8x32xf32>
    %c4_i32 = arith.constant 4 : i32
    %121 = arith.index_cast %c4_i32 : i32 to index
    %c0_32 = arith.constant 0 : index
    %c0_33 = arith.constant 0 : index
    %122 = vector.load %arg0[%121, %c0_32, %c0_33] : memref<8x8x1xi32, #tpu.memory_space<vmem>>, vector<1x8x1xi32>
    %123 = vector.shape_cast %122 : vector<1x8x1xi32> to vector<8x1xi32>
    %124 = vector.broadcast %123 : vector<8x1xi32> to vector<8x32xi32>
    %125 = arith.cmpi eq, %2, %124 : vector<8x32xi32>
    %126 = arith.extui %125 : vector<8x32xi1> to vector<8x32xi32>
    %127 = arith.sitofp %126 : vector<8x32xi32> to vector<8x32xf32>
    %cst_34 = arith.constant dense<0.000000e+00> : vector<8x128xf32>
    %128 = tpu.matmul %127, %0, %cst_34 {dimension_numbers = #tpu.dot_dimension_numbers<[1], [0], [0], [1], [0, 0, 1, 1], [], []>} : vector<8x32xf32>, vector<32x128xf32>, vector<8x128xf32> -> vector<8x128xf32>
    %129 = arith.truncf %120 : vector<8x32xf32> to vector<8x32xbf16>
    %cst_35 = arith.constant dense<0.000000e+00> : vector<8x128xf32>
    %130 = tpu.matmul %129, %1, %cst_35 {dimension_numbers = #tpu.dot_dimension_numbers<[1], [0], [0], [1], [0, 0, 1, 1], [], []>} : vector<8x32xbf16>, vector<32x128xbf16>, vector<8x128xf32> -> vector<8x128xf32>
    %131 = arith.addf %128, %130 : vector<8x128xf32>
    %132 = arith.negf %131 : vector<8x128xf32>
    %133 = math.exp %132 : vector<8x128xf32>
    %cst_36 = arith.constant 1.000000e+00 : f32
    %134 = vector.broadcast %cst_36 : f32 to vector<8x128xf32>
    %135 = arith.addf %134, %133 : vector<8x128xf32>
    %136 = arith.divf %134, %135 : vector<8x128xf32>
    %137 = vector.extract_strided_slice %136 {offsets = [0, 0], sizes = [8, 32], strides = [1, 1]} : vector<8x128xf32> to vector<8x32xf32>
    %138 = vector.extract_strided_slice %136 {offsets = [0, 32], sizes = [8, 32], strides = [1, 1]} : vector<8x128xf32> to vector<8x32xf32>
    %139 = vector.extract_strided_slice %136 {offsets = [0, 64], sizes = [8, 32], strides = [1, 1]} : vector<8x128xf32> to vector<8x32xf32>
    %cst_37 = arith.constant 2.000000e+00 : f32
    %140 = vector.broadcast %cst_37 : f32 to vector<8x32xf32>
    %141 = arith.mulf %140, %139 : vector<8x32xf32>
    %cst_38 = arith.constant 1.000000e+00 : f32
    %142 = vector.broadcast %cst_38 : f32 to vector<8x32xf32>
    %143 = arith.subf %141, %142 : vector<8x32xf32>
    %144 = vector.extract_strided_slice %136 {offsets = [0, 96], sizes = [8, 32], strides = [1, 1]} : vector<8x128xf32> to vector<8x32xf32>
    %145 = arith.mulf %138, %118 : vector<8x32xf32>
    %146 = arith.mulf %137, %143 : vector<8x32xf32>
    %147 = arith.addf %145, %146 : vector<8x32xf32>
    %148 = math.tanh %147 : vector<8x32xf32>
    %149 = arith.mulf %144, %148 : vector<8x32xf32>
    %c5_i32 = arith.constant 5 : i32
    %150 = arith.index_cast %c5_i32 : i32 to index
    %c0_39 = arith.constant 0 : index
    %c0_40 = arith.constant 0 : index
    %151 = vector.load %arg0[%150, %c0_39, %c0_40] : memref<8x8x1xi32, #tpu.memory_space<vmem>>, vector<1x8x1xi32>
    %152 = vector.shape_cast %151 : vector<1x8x1xi32> to vector<8x1xi32>
    %153 = vector.broadcast %152 : vector<8x1xi32> to vector<8x32xi32>
    %154 = arith.cmpi eq, %2, %153 : vector<8x32xi32>
    %155 = arith.extui %154 : vector<8x32xi1> to vector<8x32xi32>
    %156 = arith.sitofp %155 : vector<8x32xi32> to vector<8x32xf32>
    %cst_41 = arith.constant dense<0.000000e+00> : vector<8x128xf32>
    %157 = tpu.matmul %156, %0, %cst_41 {dimension_numbers = #tpu.dot_dimension_numbers<[1], [0], [0], [1], [0, 0, 1, 1], [], []>} : vector<8x32xf32>, vector<32x128xf32>, vector<8x128xf32> -> vector<8x128xf32>
    %158 = arith.truncf %149 : vector<8x32xf32> to vector<8x32xbf16>
    %cst_42 = arith.constant dense<0.000000e+00> : vector<8x128xf32>
    %159 = tpu.matmul %158, %1, %cst_42 {dimension_numbers = #tpu.dot_dimension_numbers<[1], [0], [0], [1], [0, 0, 1, 1], [], []>} : vector<8x32xbf16>, vector<32x128xbf16>, vector<8x128xf32> -> vector<8x128xf32>
    %160 = arith.addf %157, %159 : vector<8x128xf32>
    %161 = arith.negf %160 : vector<8x128xf32>
    %162 = math.exp %161 : vector<8x128xf32>
    %cst_43 = arith.constant 1.000000e+00 : f32
    %163 = vector.broadcast %cst_43 : f32 to vector<8x128xf32>
    %164 = arith.addf %163, %162 : vector<8x128xf32>
    %165 = arith.divf %163, %164 : vector<8x128xf32>
    %166 = vector.extract_strided_slice %165 {offsets = [0, 0], sizes = [8, 32], strides = [1, 1]} : vector<8x128xf32> to vector<8x32xf32>
    %167 = vector.extract_strided_slice %165 {offsets = [0, 32], sizes = [8, 32], strides = [1, 1]} : vector<8x128xf32> to vector<8x32xf32>
    %168 = vector.extract_strided_slice %165 {offsets = [0, 64], sizes = [8, 32], strides = [1, 1]} : vector<8x128xf32> to vector<8x32xf32>
    %cst_44 = arith.constant 2.000000e+00 : f32
    %169 = vector.broadcast %cst_44 : f32 to vector<8x32xf32>
    %170 = arith.mulf %169, %168 : vector<8x32xf32>
    %cst_45 = arith.constant 1.000000e+00 : f32
    %171 = vector.broadcast %cst_45 : f32 to vector<8x32xf32>
    %172 = arith.subf %170, %171 : vector<8x32xf32>
    %173 = vector.extract_strided_slice %165 {offsets = [0, 96], sizes = [8, 32], strides = [1, 1]} : vector<8x128xf32> to vector<8x32xf32>
    %174 = arith.mulf %167, %147 : vector<8x32xf32>
    %175 = arith.mulf %166, %172 : vector<8x32xf32>
    %176 = arith.addf %174, %175 : vector<8x32xf32>
    %177 = math.tanh %176 : vector<8x32xf32>
    %178 = arith.mulf %173, %177 : vector<8x32xf32>
    %c6_i32 = arith.constant 6 : i32
    %179 = arith.index_cast %c6_i32 : i32 to index
    %c0_46 = arith.constant 0 : index
    %c0_47 = arith.constant 0 : index
    %180 = vector.load %arg0[%179, %c0_46, %c0_47] : memref<8x8x1xi32, #tpu.memory_space<vmem>>, vector<1x8x1xi32>
    %181 = vector.shape_cast %180 : vector<1x8x1xi32> to vector<8x1xi32>
    %182 = vector.broadcast %181 : vector<8x1xi32> to vector<8x32xi32>
    %183 = arith.cmpi eq, %2, %182 : vector<8x32xi32>
    %184 = arith.extui %183 : vector<8x32xi1> to vector<8x32xi32>
    %185 = arith.sitofp %184 : vector<8x32xi32> to vector<8x32xf32>
    %cst_48 = arith.constant dense<0.000000e+00> : vector<8x128xf32>
    %186 = tpu.matmul %185, %0, %cst_48 {dimension_numbers = #tpu.dot_dimension_numbers<[1], [0], [0], [1], [0, 0, 1, 1], [], []>} : vector<8x32xf32>, vector<32x128xf32>, vector<8x128xf32> -> vector<8x128xf32>
    %187 = arith.truncf %178 : vector<8x32xf32> to vector<8x32xbf16>
    %cst_49 = arith.constant dense<0.000000e+00> : vector<8x128xf32>
    %188 = tpu.matmul %187, %1, %cst_49 {dimension_numbers = #tpu.dot_dimension_numbers<[1], [0], [0], [1], [0, 0, 1, 1], [], []>} : vector<8x32xbf16>, vector<32x128xbf16>, vector<8x128xf32> -> vector<8x128xf32>
    %189 = arith.addf %186, %188 : vector<8x128xf32>
    %190 = arith.negf %189 : vector<8x128xf32>
    %191 = math.exp %190 : vector<8x128xf32>
    %cst_50 = arith.constant 1.000000e+00 : f32
    %192 = vector.broadcast %cst_50 : f32 to vector<8x128xf32>
    %193 = arith.addf %192, %191 : vector<8x128xf32>
    %194 = arith.divf %192, %193 : vector<8x128xf32>
    %195 = vector.extract_strided_slice %194 {offsets = [0, 0], sizes = [8, 32], strides = [1, 1]} : vector<8x128xf32> to vector<8x32xf32>
    %196 = vector.extract_strided_slice %194 {offsets = [0, 32], sizes = [8, 32], strides = [1, 1]} : vector<8x128xf32> to vector<8x32xf32>
    %197 = vector.extract_strided_slice %194 {offsets = [0, 64], sizes = [8, 32], strides = [1, 1]} : vector<8x128xf32> to vector<8x32xf32>
    %cst_51 = arith.constant 2.000000e+00 : f32
    %198 = vector.broadcast %cst_51 : f32 to vector<8x32xf32>
    %199 = arith.mulf %198, %197 : vector<8x32xf32>
    %cst_52 = arith.constant 1.000000e+00 : f32
    %200 = vector.broadcast %cst_52 : f32 to vector<8x32xf32>
    %201 = arith.subf %199, %200 : vector<8x32xf32>
    %202 = vector.extract_strided_slice %194 {offsets = [0, 96], sizes = [8, 32], strides = [1, 1]} : vector<8x128xf32> to vector<8x32xf32>
    %203 = arith.mulf %196, %176 : vector<8x32xf32>
    %204 = arith.mulf %195, %201 : vector<8x32xf32>
    %205 = arith.addf %203, %204 : vector<8x32xf32>
    %206 = math.tanh %205 : vector<8x32xf32>
    %207 = arith.mulf %202, %206 : vector<8x32xf32>
    %c7_i32 = arith.constant 7 : i32
    %208 = arith.index_cast %c7_i32 : i32 to index
    %c0_53 = arith.constant 0 : index
    %c0_54 = arith.constant 0 : index
    %209 = vector.load %arg0[%208, %c0_53, %c0_54] : memref<8x8x1xi32, #tpu.memory_space<vmem>>, vector<1x8x1xi32>
    %210 = vector.shape_cast %209 : vector<1x8x1xi32> to vector<8x1xi32>
    %211 = vector.broadcast %210 : vector<8x1xi32> to vector<8x32xi32>
    %212 = arith.cmpi eq, %2, %211 : vector<8x32xi32>
    %213 = arith.extui %212 : vector<8x32xi1> to vector<8x32xi32>
    %214 = arith.sitofp %213 : vector<8x32xi32> to vector<8x32xf32>
    %cst_55 = arith.constant dense<0.000000e+00> : vector<8x128xf32>
    %215 = tpu.matmul %214, %0, %cst_55 {dimension_numbers = #tpu.dot_dimension_numbers<[1], [0], [0], [1], [0, 0, 1, 1], [], []>} : vector<8x32xf32>, vector<32x128xf32>, vector<8x128xf32> -> vector<8x128xf32>
    %216 = arith.truncf %207 : vector<8x32xf32> to vector<8x32xbf16>
    %cst_56 = arith.constant dense<0.000000e+00> : vector<8x128xf32>
    %217 = tpu.matmul %216, %1, %cst_56 {dimension_numbers = #tpu.dot_dimension_numbers<[1], [0], [0], [1], [0, 0, 1, 1], [], []>} : vector<8x32xbf16>, vector<32x128xbf16>, vector<8x128xf32> -> vector<8x128xf32>
    %218 = arith.addf %215, %217 : vector<8x128xf32>
    %219 = arith.negf %218 : vector<8x128xf32>
    %220 = math.exp %219 : vector<8x128xf32>
    %cst_57 = arith.constant 1.000000e+00 : f32
    %221 = vector.broadcast %cst_57 : f32 to vector<8x128xf32>
    %222 = arith.addf %221, %220 : vector<8x128xf32>
    %223 = arith.divf %221, %222 : vector<8x128xf32>
    %224 = vector.extract_strided_slice %223 {offsets = [0, 0], sizes = [8, 32], strides = [1, 1]} : vector<8x128xf32> to vector<8x32xf32>
    %225 = vector.extract_strided_slice %223 {offsets = [0, 32], sizes = [8, 32], strides = [1, 1]} : vector<8x128xf32> to vector<8x32xf32>
    %226 = vector.extract_strided_slice %223 {offsets = [0, 64], sizes = [8, 32], strides = [1, 1]} : vector<8x128xf32> to vector<8x32xf32>
    %cst_58 = arith.constant 2.000000e+00 : f32
    %227 = vector.broadcast %cst_58 : f32 to vector<8x32xf32>
    %228 = arith.mulf %227, %226 : vector<8x32xf32>
    %cst_59 = arith.constant 1.000000e+00 : f32
    %229 = vector.broadcast %cst_59 : f32 to vector<8x32xf32>
    %230 = arith.subf %228, %229 : vector<8x32xf32>
    %231 = vector.extract_strided_slice %223 {offsets = [0, 96], sizes = [8, 32], strides = [1, 1]} : vector<8x128xf32> to vector<8x32xf32>
    %232 = arith.mulf %225, %205 : vector<8x32xf32>
    %233 = arith.mulf %224, %230 : vector<8x32xf32>
    %234 = arith.addf %232, %233 : vector<8x32xf32>
    %235 = math.tanh %234 : vector<8x32xf32>
    %236 = arith.mulf %231, %235 : vector<8x32xf32>
    %c8_i32 = arith.constant 8 : i32
    %c0_60 = arith.constant 0 : index
    %c0_61 = arith.constant 0 : index
    %237 = vector.load %arg3[%c0_60, %c0_61] : memref<32x128xf32, #tpu.memory_space<vmem>>, vector<32x128xf32>
    %cst_62 = arith.constant dense<0.000000e+00> : vector<8x128xf32>
    %238 = tpu.matmul %236, %237, %cst_62 {dimension_numbers = #tpu.dot_dimension_numbers<[1], [0], [0], [1], [0, 0, 1, 1], [], []>} : vector<8x32xf32>, vector<32x128xf32>, vector<8x128xf32> -> vector<8x128xf32>
    %c0_63 = arith.constant 0 : index
    %c0_64 = arith.constant 0 : index
    %239 = vector.load %arg4[%c0_63, %c0_64] : memref<1x128xf32, #tpu.memory_space<vmem>>, vector<1x128xf32>
    %240 = vector.broadcast %239 : vector<1x128xf32> to vector<8x128xf32>
    %241 = arith.addf %238, %240 : vector<8x128xf32>
    %c0_65 = arith.constant 0 : index
    %c0_66 = arith.constant 0 : index
    %242 = vector.load %arg5[%c0_65, %c0_66] : memref<8x128xf32, #tpu.memory_space<vmem>>, vector<8x128xf32>
    tpu.vector_store %arg5[%c0_65, %c0_66], %241 {strides = array<i32>} : memref<8x128xf32, #tpu.memory_space<vmem>>, vector<8x128xf32>,
    return
  }
}

</mosaic_0001>

<llo_original>
// kernel: _lambda_.1
$region0: #{_lambda_.1}
  #allocation0 [shape = 'u32[]', space=smem, size = 0x4, offset = 0x4, fixed_abs, tag = 'smem constant byte address 0x4 - core index']
  #allocation1 [shape = 'u32[72,128]{1,0:T(1,128)}', space=vmem, size = 0x9000, scoped, tag = 'internal scratch']
  %s0 = inlined_call_operand.vmem [shape: s32[8,8,1], index: 0, kind: input, shape index: {}]
  %s1 = inlined_call_operand.vmem [shape: f32[32,128], index: 1, kind: input, shape index: {}]
  %s2 = inlined_call_operand.vmem [shape: bf16[32,128], index: 2, kind: input, shape index: {}]
  %s3 = inlined_call_operand.vmem [shape: f32[32,128], index: 3, kind: input, shape index: {}]
  %s4 = inlined_call_operand.vmem [shape: f32[1,128], index: 4, kind: input, shape index: {}]
  %s5 = inlined_call_operand.vmem [shape: f32[8,128], index: 5, kind: output, shape index: {}]
  %s6 = sld [smem:[#allocation0]]
  $region30: #{_lambda_.1} parent=0
    _
  %s8 = ssub.s32 1, %s6
  %s9 = scalar_select 0, %s8, %s6
  // Predicated region
  $region2: #{_lambda_.1} parent=0 // pred_check
    _
  $region3: #{_lambda_.1} parent=0 // pred_check_branch
    %11 = sbr.rel (0) target = $region5
  $region4: #{_lambda_.1} parent=0 // pred_region
    _
  $region5: #{_lambda_.1} parent=0 // pred_fallthru
    _
  // Predicated region
  $region6: #{_lambda_.1} parent=0 // pred_check
    _
  $region7: #{_lambda_.1} parent=0 // pred_check_branch
    %13 = sbr.rel (0) target = $region9
  $region8: #{_lambda_.1} parent=0 // pred_region
    _
  $region9: #{_lambda_.1} parent=0 // pred_fallthru
    _
  // Predicated region
  $region10: #{_lambda_.1} parent=0 // pred_check
    _
  $region11: #{_lambda_.1} parent=0 // pred_check_branch
    %15 = sbr.rel (0) target = $region13
  $region12: #{_lambda_.1} parent=0 // pred_region
    _
  $region13: #{_lambda_.1} parent=0 // pred_fallthru
    _
  // Predicated region
  $region14: #{_lambda_.1} parent=0 // pred_check
    _
  $region15: #{_lambda_.1} parent=0 // pred_check_branch
    %17 = sbr.rel (0) target = $region17
  $region16: #{_lambda_.1} parent=0 // pred_region
    _
  $region17: #{_lambda_.1} parent=0 // pred_fallthru
    _
  // Predicated region
  $region18: #{_lambda_.1} parent=0 // pred_check
    _
  $region19: #{_lambda_.1} parent=0 // pred_check_branch
    %19 = sbr.rel (0) target = $region21
  $region20: #{_lambda_.1} parent=0 // pred_region
    _
  $region21: #{_lambda_.1} parent=0 // pred_fallthru
    _
  %v21 = vld [vmem:[%s1] sm:$0xff]
  %v22 = vld [vmem:[%s1 + $0x8] sm:$0xff]
  %v23 = vld [vmem:[%s1 + $0x10] sm:$0xff]
  %v24 = vld [vmem:[%s1 + $0x18] sm:$0xff]
  %v25 = vld [vmem:[%s2] sm:$0xf]
  %v26 = vld [vmem:[%s2 + $0x4] sm:$0xf]
  %v27 = vld [vmem:[%s2 + $0x8] sm:$0xf]
  %v28 = vld [vmem:[%s2 + $0xc] sm:$0xf]
  %v29 = vlaneseq
  %v30 = vand.u32 %v29, 127
  %v31 = vld [vmem:[%s0] sm:$0xff]
  %32 = vset.pattern.permute.xlu0 0
  %33 = vperm.xlu0 %32, %v31
  %v34 = vpop.permute.xlu0 %33
  %vm35 = vcmp.eq.s32.totalorder %v30, %v34
  %v36 = vsel %vm35, 1, 0
  %v37 = vcvt.s32.f32 %v36
  %v42 = vunpack.c.l.b16 %v25
  %v43 = vunpack.c.l.b16 %v26
  %v44 = vunpack.c.l.b16 %v27
  %v45 = vunpack.c.l.b16 %v28
  %v46 = vpack.c.b16 %v43, %v42
  %v47 = vpack.c.b16 %v45, %v44
  %vm50 = vcmask 261120
  %v52 = vsel %vm50, 0, 0
  %54 = vmatpush.bf16.msra.mxu0 0
  %55 = vmatpush.bf16.msra.mxu0 0
  %56 = vmatpush.bf16.msra.mxu0 0
  %57 = vmatpush.bf16.msra.mxu0 0
  %58 = vmatpush.bf16.msra.mxu0 0
  %59 = vmatpush.bf16.msra.mxu0 0
  %60 = vmatpush.bf16.msra.mxu0 %v47
  %61 = vmatpush.bf16.msra.mxu0 %v46
  %62 = vmatmul.bf16.gmra.mxu0 %v52
  %v63 = vpop.f32.mrf.mxu0
  %v64 = vadd.f32 0.0, %v63
  %v65 = vpop.f32.mrf.mxu0
  %66 = vdwg.mxu0
  %v68 = vsel %vm50, %v37, 0
  %70 = vmatpush.msra.mxu0 0.0
  %71 = vmatpush.msra.mxu0 0.0
  %72 = vmatpush.msra.mxu0 0.0
  %73 = vmatpush.msra.mxu0 0.0
  %74 = vmatpush.msra.mxu0 0.0
  %75 = vmatpush.msra.mxu0 0.0
  %76 = vmatpush.msra.mxu0 0.0
  %77 = vmatpush.msra.mxu0 0.0
  %78 = vmatpush.msra.mxu0 0.0
  %79 = vmatpush.msra.mxu0 0.0
  %80 = vmatpush.msra.mxu0 0.0
  %81 = vmatpush.msra.mxu0 0.0
  %82 = vmatpush.msra.mxu0 %v24
  %83 = vmatpush.msra.mxu0 %v23
  %84 = vmatpush.msra.mxu0 %v22
  %85 = vmatpush.msra.mxu0 %v21
  %86 = vmatmul.f32.gmra.mxu0 %v68
  %v87 = vpop.f32.mrf.mxu0
  %v88 = vadd.f32 %v64, %v87
  %89 = vdwg.mxu0
  %v90 = vxor.u32 %v88, 2147483648
  %v91 = vmul.f32 %v90, 1.442695
  %v92 = vpow.pop %v91
  %v93 = vadd.f32 %v92, 1.0
  %v94 = vrcp.pop %v93
  %v95 = vmul.f32 %v93, %v94
  %v96 = vsub.f32 1.0, %v95
  %v97 = vmul.f32 %v94, %v96
  %v98 = vadd.f32 %v94, %v97
  %vm99 = vweird.f32 %v93
  %vm100 = vweird.f32 %v94
  %vm101 = vmor %vm99, %vm100
  %v102 = vsel %vm101, %v94, %v98
  %v103 = vand.u32 2147483647, %v93
  %vm104 = vcmp.eq.f32.partialorder %v103, 8.507059e+37
  %v105 = vand.u32 %v93, 2147483648
  %v106 = vor.u32 1.1754944e-38, %v105
  %v107 = vsel %vm104, %v106, %v102
  %v108 = vmul.f32 1.0, %v107
  %v109 = vmul.f32 %v108, 2.0
  %v110 = vsub.f32 %v109, 1.0
  %v111 = vmul.f32 %v108, 0.0
  %113 = vrot.lane.b32.xlu0 %v110, 64
  %v114 = vpop.permute.xlu0 %113
  %v116 = vmul.f32 %v108, %v114
  %118 = vrot.lane.b32.xlu0 %v116, 32
  %v119 = vpop.permute.xlu0 %118
  %v121 = vadd.f32 %v111, %v119
  %v122 = vtanh.pop %v121
  %124 = vrot.lane.b32.xlu0 %v122, 64
  %v125 = vpop.permute.xlu0 %124
  %v127 = vmul.f32 %v108, %v125
  %s128 = scalar_lea.vmem %s0, 8
  %v129 = vld [vmem:[%s128] sm:$0xff]
  %130 = vset.pattern.permute.xlu0 0
  %131 = vperm.xlu0 %130, %v129
  %v132 = vpop.permute.xlu0 %131
  %vm133 = vcmp.eq.s32.totalorder %v30, %v132
  %v134 = vsel %vm133, 1, 0
  %v135 = vcvt.s32.f32 %v134
  %v136 = vpack.c.bf16 %v127, %v127
  %138 = vrot.lane.b32.xlu0 %v136, 32
  %v139 = vpop.permute.xlu0 %138
  %v141 = vsel %vm50, %v139, 0
  %143 = vmatpush.bf16.msra.mxu0 0
  %144 = vmatpush.bf16.msra.mxu0 0
  %145 = vmatpush.bf16.msra.mxu0 0
  %146 = vmatpush.bf16.msra.mxu0 0
  %147 = vmatpush.bf16.msra.mxu0 0
  %148 = vmatpush.bf16.msra.mxu0 0
  %149 = vmatpush.bf16.msra.mxu0 %v47
  %150 = vmatpush.bf16.msra.mxu0 %v46
  %151 = vmatmul.bf16.gmra.mxu0 %v141
  %v152 = vpop.f32.mrf.mxu0
  %v153 = vadd.f32 0.0, %v152
  %v154 = vpop.f32.mrf.mxu0
  %155 = vdwg.mxu0
  %v157 = vsel %vm50, %v135, 0
  %159 = vmatpush.msra.mxu0 0.0
  %160 = vmatpush.msra.mxu0 0.0
  %161 = vmatpush.msra.mxu0 0.0
  %162 = vmatpush.msra.mxu0 0.0
  %163 = vmatpush.msra.mxu0 0.0
  %164 = vmatpush.msra.mxu0 0.0
  %165 = vmatpush.msra.mxu0 0.0
  %166 = vmatpush.msra.mxu0 0.0
  %167 = vmatpush.msra.mxu0 0.0
  %168 = vmatpush.msra.mxu0 0.0
  %169 = vmatpush.msra.mxu0 0.0
  %170 = vmatpush.msra.mxu0 0.0
  %171 = vmatpush.msra.mxu0 %v24
  %172 = vmatpush.msra.mxu0 %v23
  %173 = vmatpush.msra.mxu0 %v22
  %174 = vmatpush.msra.mxu0 %v21
  %175 = vmatmul.f32.gmra.mxu0 %v157
  %v176 = vpop.f32.mrf.mxu0
  %v177 = vadd.f32 %v153, %v176
  %178 = vdwg.mxu0
  %v179 = vxor.u32 %v177, 2147483648
  %v180 = vmul.f32 %v179, 1.442695
  %v181 = vpow.pop %v180
  %v182 = vadd.f32 %v181, 1.0
  %v183 = vrcp.pop %v182
  %v184 = vmul.f32 %v182, %v183
  %v185 = vsub.f32 1.0, %v184
  %v186 = vmul.f32 %v183, %v185
  %v187 = vadd.f32 %v183, %v186
  %vm188 = vweird.f32 %v182
  %vm189 = vweird.f32 %v183
  %vm190 = vmor %vm188, %vm189
  %v191 = vsel %vm190, %v183, %v187
  %v192 = vand.u32 2147483647, %v182
  %vm193 = vcmp.eq.f32.partialorder %v192, 8.507059e+37
  %v194 = vand.u32 %v182, 2147483648
  %v195 = vor.u32 1.1754944e-38, %v194
  %v196 = vsel %vm193, %v195, %v191
  %v197 = vmul.f32 1.0, %v196
  %v198 = vmul.f32 %v197, 2.0
  %v199 = vsub.f32 %v198, 1.0
  %v200 = vmul.f32 %v197, %v121
  %202 = vrot.lane.b32.xlu0 %v199, 64
  %v203 = vpop.permute.xlu0 %202
  %v205 = vmul.f32 %v197, %v203
  %207 = vrot.lane.b32.xlu0 %v205, 32
  %v208 = vpop.permute.xlu0 %207
  %v210 = vadd.f32 %v200, %v208
  %v211 = vtanh.pop %v210
  %213 = vrot.lane.b32.xlu0 %v211, 64
  %v214 = vpop.permute.xlu0 %213
  %v216 = vmul.f32 %v197, %v214
  %s217 = scalar_lea.vmem %s0, 16
  %v218 = vld [vmem:[%s217] sm:$0xff]
  %219 = vset.pattern.permute.xlu0 0
  %220 = vperm.xlu0 %219, %v218
  %v221 = vpop.permute.xlu0 %220
  %vm222 = vcmp.eq.s32.totalorder %v30, %v221
  %v223 = vsel %vm222, 1, 0
  %v224 = vcvt.s32.f32 %v223
  %v225 = vpack.c.bf16 %v216, %v216
  %227 = vrot.lane.b32.xlu0 %v225, 32
  %v228 = vpop.permute.xlu0 %227
  %v230 = vsel %vm50, %v228, 0
  %232 = vmatpush.bf16.msra.mxu0 0
  %233 = vmatpush.bf16.msra.mxu0 0
  %234 = vmatpush.bf16.msra.mxu0 0
  %235 = vmatpush.bf16.msra.mxu0 0
  %236 = vmatpush.bf16.msra.mxu0 0
  %237 = vmatpush.bf16.msra.mxu0 0
  %238 = vmatpush.bf16.msra.mxu0 %v47
  %239 = vmatpush.bf16.msra.mxu0 %v46
  %240 = vmatmul.bf16.gmra.mxu0 %v230
  %v241 = vpop.f32.mrf.mxu0
  %v242 = vadd.f32 0.0, %v241
  %v243 = vpop.f32.mrf.mxu0
  %244 = vdwg.mxu0
  %v246 = vsel %vm50, %v224, 0
  %248 = vmatpush.msra.mxu0 0.0
  %249 = vmatpush.msra.mxu0 0.0
  %250 = vmatpush.msra.mxu0 0.0
  %251 = vmatpush.msra.mxu0 0.0
  %252 = vmatpush.msra.mxu0 0.0
  %253 = vmatpush.msra.mxu0 0.0
  %254 = vmatpush.msra.mxu0 0.0
  %255 = vmatpush.msra.mxu0 0.0
  %256 = vmatpush.msra.mxu0 0.0
  %257 = vmatpush.msra.mxu0 0.0
  %258 = vmatpush.msra.mxu0 0.0
  %259 = vmatpush.msra.mxu0 0.0
  %260 = vmatpush.msra.mxu0 %v24
  %261 = vmatpush.msra.mxu0 %v23
  %262 = vmatpush.msra.mxu0 %v22
  %263 = vmatpush.msra.mxu0 %v21
  %264 = vmatmul.f32.gmra.mxu0 %v246
  %v265 = vpop.f32.mrf.mxu0
  %v266 = vadd.f32 %v242, %v265
  %267 = vdwg.mxu0
  %v268 = vxor.u32 %v266, 2147483648
  %v269 = vmul.f32 %v268, 1.442695
  %v270 = vpow.pop %v269
  %v271 = vadd.f32 %v270, 1.0
  %v272 = vrcp.pop %v271
  %v273 = vmul.f32 %v271, %v272
  %v274 = vsub.f32 1.0, %v273
  %v275 = vmul.f32 %v272, %v274
  %v276 = vadd.f32 %v272, %v275
  %vm277 = vweird.f32 %v271
  %vm278 = vweird.f32 %v272
  %vm279 = vmor %vm277, %vm278
  %v280 = vsel %vm279, %v272, %v276
  %v281 = vand.u32 2147483647, %v271
  %vm282 = vcmp.eq.f32.partialorder %v281, 8.507059e+37
  %v283 = vand.u32 %v271, 2147483648
  %v284 = vor.u32 1.1754944e-38, %v283
  %v285 = vsel %vm282, %v284, %v280
  %v286 = vmul.f32 1.0, %v285
  %v287 = vmul.f32 %v286, 2.0
  %v288 = vsub.f32 %v287, 1.0
  %v289 = vmul.f32 %v286, %v210
  %291 = vrot.lane.b32.xlu0 %v288, 64
  %v292 = vpop.permute.xlu0 %291
  %v294 = vmul.f32 %v286, %v292
  %296 = vrot.lane.b32.xlu0 %v294, 32
  %v297 = vpop.permute.xlu0 %296
  %v299 = vadd.f32 %v289, %v297
  %v300 = vtanh.pop %v299
  %302 = vrot.lane.b32.xlu0 %v300, 64
  %v303 = vpop.permute.xlu0 %302
  %v305 = vmul.f32 %v286, %v303
  %s306 = scalar_lea.vmem %s0, 24
  %v307 = vld [vmem:[%s306] sm:$0xff]
  %308 = vset.pattern.permute.xlu0 0
  %309 = vperm.xlu0 %308, %v307
  %v310 = vpop.permute.xlu0 %309
  %vm311 = vcmp.eq.s32.totalorder %v30, %v310
  %v312 = vsel %vm311, 1, 0
  %v313 = vcvt.s32.f32 %v312
  %v314 = vpack.c.bf16 %v305, %v305
  %316 = vrot.lane.b32.xlu0 %v314, 32
  %v317 = vpop.permute.xlu0 %316
  %v319 = vsel %vm50, %v317, 0
  %321 = vmatpush.bf16.msra.mxu0 0
  %322 = vmatpush.bf16.msra.mxu0 0
  %323 = vmatpush.bf16.msra.mxu0 0
  %324 = vmatpush.bf16.msra.mxu0 0
  %325 = vmatpush.bf16.msra.mxu0 0
  %326 = vmatpush.bf16.msra.mxu0 0
  %327 = vmatpush.bf16.msra.mxu0 %v47
  %328 = vmatpush.bf16.msra.mxu0 %v46
  %329 = vmatmul.bf16.gmra.mxu0 %v319
  %v330 = vpop.f32.mrf.mxu0
  %v331 = vadd.f32 0.0, %v330
  %v332 = vpop.f32.mrf.mxu0
  %333 = vdwg.mxu0
  %v335 = vsel %vm50, %v313, 0
  %337 = vmatpush.msra.mxu0 0.0
  %338 = vmatpush.msra.mxu0 0.0
  %339 = vmatpush.msra.mxu0 0.0
  %340 = vmatpush.msra.mxu0 0.0
  %341 = vmatpush.msra.mxu0 0.0
  %342 = vmatpush.msra.mxu0 0.0
  %343 = vmatpush.msra.mxu0 0.0
  %344 = vmatpush.msra.mxu0 0.0
  %345 = vmatpush.msra.mxu0 0.0
  %346 = vmatpush.msra.mxu0 0.0
  %347 = vmatpush.msra.mxu0 0.0
  %348 = vmatpush.msra.mxu0 0.0
  %349 = vmatpush.msra.mxu0 %v24
  %350 = vmatpush.msra.mxu0 %v23
  %351 = vmatpush.msra.mxu0 %v22
  %352 = vmatpush.msra.mxu0 %v21
  %353 = vmatmul.f32.gmra.mxu0 %v335
  %v354 = vpop.f32.mrf.mxu0
  %v355 = vadd.f32 %v331, %v354
  %356 = vdwg.mxu0
  %v357 = vxor.u32 %v355, 2147483648
  %v358 = vmul.f32 %v357, 1.442695
  %v359 = vpow.pop %v358
  %v360 = vadd.f32 %v359, 1.0
  %v361 = vrcp.pop %v360
  %v362 = vmul.f32 %v360, %v361
  %v363 = vsub.f32 1.0, %v362
  %v364 = vmul.f32 %v361, %v363
  %v365 = vadd.f32 %v361, %v364
  %vm366 = vweird.f32 %v360
  %vm367 = vweird.f32 %v361
  %vm368 = vmor %vm366, %vm367
  %v369 = vsel %vm368, %v361, %v365
  %v370 = vand.u32 2147483647, %v360
  %vm371 = vcmp.eq.f32.partialorder %v370, 8.507059e+37
  %v372 = vand.u32 %v360, 2147483648
  %v373 = vor.u32 1.1754944e-38, %v372
  %v374 = vsel %vm371, %v373, %v369
  %v375 = vmul.f32 1.0, %v374
  %v376 = vmul.f32 %v375, 2.0
  %v377 = vsub.f32 %v376, 1.0
  %v378 = vmul.f32 %v375, %v299
  %380 = vrot.lane.b32.xlu0 %v377, 64
  %v381 = vpop.permute.xlu0 %380
  %v383 = vmul.f32 %v375, %v381
  %385 = vrot.lane.b32.xlu0 %v383, 32
  %v386 = vpop.permute.xlu0 %385
  %v388 = vadd.f32 %v378, %v386
  %v389 = vtanh.pop %v388
  %391 = vrot.lane.b32.xlu0 %v389, 64
  %v392 = vpop.permute.xlu0 %391
  %v394 = vmul.f32 %v375, %v392
  %s395 = scalar_lea.vmem %s0, 32
  %v396 = vld [vmem:[%s395] sm:$0xff]
  %397 = vset.pattern.permute.xlu0 0
  %398 = vperm.xlu0 %397, %v396
  %v399 = vpop.permute.xlu0 %398
  %vm400 = vcmp.eq.s32.totalorder %v30, %v399
  %v401 = vsel %vm400, 1, 0
  %v402 = vcvt.s32.f32 %v401
  %v403 = vpack.c.bf16 %v394, %v394
  %405 = vrot.lane.b32.xlu0 %v403, 32
  %v406 = vpop.permute.xlu0 %405
  %v408 = vsel %vm50, %v406, 0
  %410 = vmatpush.bf16.msra.mxu0 0
  %411 = vmatpush.bf16.msra.mxu0 0
  %412 = vmatpush.bf16.msra.mxu0 0
  %413 = vmatpush.bf16.msra.mxu0 0
  %414 = vmatpush.bf16.msra.mxu0 0
  %415 = vmatpush.bf16.msra.mxu0 0
  %416 = vmatpush.bf16.msra.mxu0 %v47
  %417 = vmatpush.bf16.msra.mxu0 %v46
  %418 = vmatmul.bf16.gmra.mxu0 %v408
  %v419 = vpop.f32.mrf.mxu0
  %v420 = vadd.f32 0.0, %v419
  %v421 = vpop.f32.mrf.mxu0
  %422 = vdwg.mxu0
  %v424 = vsel %vm50, %v402, 0
  %426 = vmatpush.msra.mxu0 0.0
  %427 = vmatpush.msra.mxu0 0.0
  %428 = vmatpush.msra.mxu0 0.0
  %429 = vmatpush.msra.mxu0 0.0
  %430 = vmatpush.msra.mxu0 0.0
  %431 = vmatpush.msra.mxu0 0.0
  %432 = vmatpush.msra.mxu0 0.0
  %433 = vmatpush.msra.mxu0 0.0
  %434 = vmatpush.msra.mxu0 0.0
  %435 = vmatpush.msra.mxu0 0.0
  %436 = vmatpush.msra.mxu0 0.0
  %437 = vmatpush.msra.mxu0 0.0
  %438 = vmatpush.msra.mxu0 %v24
  %439 = vmatpush.msra.mxu0 %v23
  %440 = vmatpush.msra.mxu0 %v22
  %441 = vmatpush.msra.mxu0 %v21
  %442 = vmatmul.f32.gmra.mxu0 %v424
  %v443 = vpop.f32.mrf.mxu0
  %v444 = vadd.f32 %v420, %v443
  %445 = vdwg.mxu0
  %v446 = vxor.u32 %v444, 2147483648
  %v447 = vmul.f32 %v446, 1.442695
  %v448 = vpow.pop %v447
  %v449 = vadd.f32 %v448, 1.0
  %v450 = vrcp.pop %v449
  %v451 = vmul.f32 %v449, %v450
  %v452 = vsub.f32 1.0, %v451
  %v453 = vmul.f32 %v450, %v452
  %v454 = vadd.f32 %v450, %v453
  %vm455 = vweird.f32 %v449
  %vm456 = vweird.f32 %v450
  %vm457 = vmor %vm455, %vm456
  %v458 = vsel %vm457, %v450, %v454
  %v459 = vand.u32 2147483647, %v449
  %vm460 = vcmp.eq.f32.partialorder %v459, 8.507059e+37
  %v461 = vand.u32 %v449, 2147483648
  %v462 = vor.u32 1.1754944e-38, %v461
  %v463 = vsel %vm460, %v462, %v458
  %v464 = vmul.f32 1.0, %v463
  %v465 = vmul.f32 %v464, 2.0
  %v466 = vsub.f32 %v465, 1.0
  %v467 = vmul.f32 %v464, %v388
  %469 = vrot.lane.b32.xlu0 %v466, 64
  %v470 = vpop.permute.xlu0 %469
  %v472 = vmul.f32 %v464, %v470
  %474 = vrot.lane.b32.xlu0 %v472, 32
  %v475 = vpop.permute.xlu0 %474
  %v477 = vadd.f32 %v467, %v475
  %v478 = vtanh.pop %v477
  %480 = vrot.lane.b32.xlu0 %v478, 64
  %v481 = vpop.permute.xlu0 %480
  %v483 = vmul.f32 %v464, %v481
  %s484 = scalar_lea.vmem %s0, 40
  %v485 = vld [vmem:[%s484] sm:$0xff]
  %486 = vset.pattern.permute.xlu0 0
  %487 = vperm.xlu0 %486, %v485
  %v488 = vpop.permute.xlu0 %487
  %vm489 = vcmp.eq.s32.totalorder %v30, %v488
  %v490 = vsel %vm489, 1, 0
  %v491 = vcvt.s32.f32 %v490
  %v492 = vpack.c.bf16 %v483, %v483
  %494 = vrot.lane.b32.xlu0 %v492, 32
  %v495 = vpop.permute.xlu0 %494
  %v497 = vsel %vm50, %v495, 0
  %499 = vmatpush.bf16.msra.mxu0 0
  %500 = vmatpush.bf16.msra.mxu0 0
  %501 = vmatpush.bf16.msra.mxu0 0
  %502 = vmatpush.bf16.msra.mxu0 0
  %503 = vmatpush.bf16.msra.mxu0 0
  %504 = vmatpush.bf16.msra.mxu0 0
  %505 = vmatpush.bf16.msra.mxu0 %v47
  %506 = vmatpush.bf16.msra.mxu0 %v46
  %507 = vmatmul.bf16.gmra.mxu0 %v497
  %v508 = vpop.f32.mrf.mxu0
  %v509 = vadd.f32 0.0, %v508
  %v510 = vpop.f32.mrf.mxu0
  %511 = vdwg.mxu0
  %v513 = vsel %vm50, %v491, 0
  %515 = vmatpush.msra.mxu0 0.0
  %516 = vmatpush.msra.mxu0 0.0
  %517 = vmatpush.msra.mxu0 0.0
  %518 = vmatpush.msra.mxu0 0.0
  %519 = vmatpush.msra.mxu0 0.0
  %520 = vmatpush.msra.mxu0 0.0
  %521 = vmatpush.msra.mxu0 0.0
  %522 = vmatpush.msra.mxu0 0.0
  %523 = vmatpush.msra.mxu0 0.0
  %524 = vmatpush.msra.mxu0 0.0
  %525 = vmatpush.msra.mxu0 0.0
  %526 = vmatpush.msra.mxu0 0.0
  %527 = vmatpush.msra.mxu0 %v24
  %528 = vmatpush.msra.mxu0 %v23
  %529 = vmatpush.msra.mxu0 %v22
  %530 = vmatpush.msra.mxu0 %v21
  %531 = vmatmul.f32.gmra.mxu0 %v513
  %v532 = vpop.f32.mrf.mxu0
  %v533 = vadd.f32 %v509, %v532
  %534 = vdwg.mxu0
  %v535 = vxor.u32 %v533, 2147483648
  %v536 = vmul.f32 %v535, 1.442695
  %v537 = vpow.pop %v536
  %v538 = vadd.f32 %v537, 1.0
  %v539 = vrcp.pop %v538
  %v540 = vmul.f32 %v538, %v539
  %v541 = vsub.f32 1.0, %v540
  %v542 = vmul.f32 %v539, %v541
  %v543 = vadd.f32 %v539, %v542
  %vm544 = vweird.f32 %v538
  %vm545 = vweird.f32 %v539
  %vm546 = vmor %vm544, %vm545
  %v547 = vsel %vm546, %v539, %v543
  %v548 = vand.u32 2147483647, %v538
  %vm549 = vcmp.eq.f32.partialorder %v548, 8.507059e+37
  %v550 = vand.u32 %v538, 2147483648
  %v551 = vor.u32 1.1754944e-38, %v550
  %v552 = vsel %vm549, %v551, %v547
  %v553 = vmul.f32 1.0, %v552
  %v554 = vmul.f32 %v553, 2.0
  %v555 = vsub.f32 %v554, 1.0
  %v556 = vmul.f32 %v553, %v477
  %558 = vrot.lane.b32.xlu0 %v555, 64
  %v559 = vpop.permute.xlu0 %558
  %v561 = vmul.f32 %v553, %v559
  %563 = vrot.lane.b32.xlu0 %v561, 32
  %v564 = vpop.permute.xlu0 %563
  %v566 = vadd.f32 %v556, %v564
  %v567 = vtanh.pop %v566
  %569 = vrot.lane.b32.xlu0 %v567, 64
  %v570 = vpop.permute.xlu0 %569
  %v572 = vmul.f32 %v553, %v570
  %s573 = scalar_lea.vmem %s0, 48
  %v574 = vld [vmem:[%s573] sm:$0xff]
  %575 = vset.pattern.permute.xlu0 0
  %576 = vperm.xlu0 %575, %v574
  %v577 = vpop.permute.xlu0 %576
  %vm578 = vcmp.eq.s32.totalorder %v30, %v577
  %v579 = vsel %vm578, 1, 0
  %v580 = vcvt.s32.f32 %v579
  %v581 = vpack.c.bf16 %v572, %v572
  %583 = vrot.lane.b32.xlu0 %v581, 32
  %v584 = vpop.permute.xlu0 %583
  %v586 = vsel %vm50, %v584, 0
  %588 = vmatpush.bf16.msra.mxu0 0
  %589 = vmatpush.bf16.msra.mxu0 0
  %590 = vmatpush.bf16.msra.mxu0 0
  %591 = vmatpush.bf16.msra.mxu0 0
  %592 = vmatpush.bf16.msra.mxu0 0
  %593 = vmatpush.bf16.msra.mxu0 0
  %594 = vmatpush.bf16.msra.mxu0 %v47
  %595 = vmatpush.bf16.msra.mxu0 %v46
  %596 = vmatmul.bf16.gmra.mxu0 %v586
  %v597 = vpop.f32.mrf.mxu0
  %v598 = vadd.f32 0.0, %v597
  %v599 = vpop.f32.mrf.mxu0
  %600 = vdwg.mxu0
  %v602 = vsel %vm50, %v580, 0
  %604 = vmatpush.msra.mxu0 0.0
  %605 = vmatpush.msra.mxu0 0.0
  %606 = vmatpush.msra.mxu0 0.0
  %607 = vmatpush.msra.mxu0 0.0
  %608 = vmatpush.msra.mxu0 0.0
  %609 = vmatpush.msra.mxu0 0.0
  %610 = vmatpush.msra.mxu0 0.0
  %611 = vmatpush.msra.mxu0 0.0
  %612 = vmatpush.msra.mxu0 0.0
  %613 = vmatpush.msra.mxu0 0.0
  %614 = vmatpush.msra.mxu0 0.0
  %615 = vmatpush.msra.mxu0 0.0
  %616 = vmatpush.msra.mxu0 %v24
  %617 = vmatpush.msra.mxu0 %v23
  %618 = vmatpush.msra.mxu0 %v22
  %619 = vmatpush.msra.mxu0 %v21
  %620 = vmatmul.f32.gmra.mxu0 %v602
  %v621 = vpop.f32.mrf.mxu0
  %v622 = vadd.f32 %v598, %v621
  %623 = vdwg.mxu0
  %v624 = vxor.u32 %v622, 2147483648
  %v625 = vmul.f32 %v624, 1.442695
  %v626 = vpow.pop %v625
  %v627 = vadd.f32 %v626, 1.0
  %v628 = vrcp.pop %v627
  %v629 = vmul.f32 %v627, %v628
  %v630 = vsub.f32 1.0, %v629
  %v631 = vmul.f32 %v628, %v630
  %v632 = vadd.f32 %v628, %v631
  %vm633 = vweird.f32 %v627
  %vm634 = vweird.f32 %v628
  %vm635 = vmor %vm633, %vm634
  %v636 = vsel %vm635, %v628, %v632
  %v637 = vand.u32 2147483647, %v627
  %vm638 = vcmp.eq.f32.partialorder %v637, 8.507059e+37
  %v639 = vand.u32 %v627, 2147483648
  %v640 = vor.u32 1.1754944e-38, %v639
  %v641 = vsel %vm638, %v640, %v636
  %v642 = vmul.f32 1.0, %v641
  %v643 = vmul.f32 %v642, 2.0
  %v644 = vsub.f32 %v643, 1.0
  %v645 = vmul.f32 %v642, %v566
  %647 = vrot.lane.b32.xlu0 %v644, 64
  %v648 = vpop.permute.xlu0 %647
  %v650 = vmul.f32 %v642, %v648
  %652 = vrot.lane.b32.xlu0 %v650, 32
  %v653 = vpop.permute.xlu0 %652
  %v655 = vadd.f32 %v645, %v653
  %v656 = vtanh.pop %v655
  %658 = vrot.lane.b32.xlu0 %v656, 64
  %v659 = vpop.permute.xlu0 %658
  %v661 = vmul.f32 %v642, %v659
  %s662 = scalar_lea.vmem %s0, 56
  %v663 = vld [vmem:[%s662] sm:$0xff]
  %664 = vset.pattern.permute.xlu0 0
  %665 = vperm.xlu0 %664, %v663
  %v666 = vpop.permute.xlu0 %665
  %vm667 = vcmp.eq.s32.totalorder %v30, %v666
  %v668 = vsel %vm667, 1, 0
  %v669 = vcvt.s32.f32 %v668
  %v670 = vpack.c.bf16 %v661, %v661
  %672 = vrot.lane.b32.xlu0 %v670, 32
  %v673 = vpop.permute.xlu0 %672
  %v675 = vsel %vm50, %v673, 0
  %677 = vmatpush.bf16.msra.mxu0 0
  %678 = vmatpush.bf16.msra.mxu0 0
  %679 = vmatpush.bf16.msra.mxu0 0
  %680 = vmatpush.bf16.msra.mxu0 0
  %681 = vmatpush.bf16.msra.mxu0 0
  %682 = vmatpush.bf16.msra.mxu0 0
  %683 = vmatpush.bf16.msra.mxu0 %v47
  %684 = vmatpush.bf16.msra.mxu0 %v46
  %685 = vmatmul.bf16.gmra.mxu0 %v675
  %v686 = vpop.f32.mrf.mxu0
  %v687 = vadd.f32 0.0, %v686
  %v688 = vpop.f32.mrf.mxu0
  %689 = vdwg.mxu0
  %v691 = vsel %vm50, %v669, 0
  %693 = vmatpush.msra.mxu0 0.0
  %694 = vmatpush.msra.mxu0 0.0
  %695 = vmatpush.msra.mxu0 0.0
  %696 = vmatpush.msra.mxu0 0.0
  %697 = vmatpush.msra.mxu0 0.0
  %698 = vmatpush.msra.mxu0 0.0
  %699 = vmatpush.msra.mxu0 0.0
  %700 = vmatpush.msra.mxu0 0.0
  %701 = vmatpush.msra.mxu0 0.0
  %702 = vmatpush.msra.mxu0 0.0
  %703 = vmatpush.msra.mxu0 0.0
  %704 = vmatpush.msra.mxu0 0.0
  %705 = vmatpush.msra.mxu0 %v24
  %706 = vmatpush.msra.mxu0 %v23
  %707 = vmatpush.msra.mxu0 %v22
  %708 = vmatpush.msra.mxu0 %v21
  %709 = vmatmul.f32.gmra.mxu0 %v691
  %v710 = vpop.f32.mrf.mxu0
  %v711 = vadd.f32 %v687, %v710
  %712 = vdwg.mxu0
  %v713 = vxor.u32 %v711, 2147483648
  %v714 = vmul.f32 %v713, 1.442695
  %v715 = vpow.pop %v714
  %v716 = vadd.f32 %v715, 1.0
  %v717 = vrcp.pop %v716
  %v718 = vmul.f32 %v716, %v717
  %v719 = vsub.f32 1.0, %v718
  %v720 = vmul.f32 %v717, %v719
  %v721 = vadd.f32 %v717, %v720
  %vm722 = vweird.f32 %v716
  %vm723 = vweird.f32 %v717
  %vm724 = vmor %vm722, %vm723
  %v725 = vsel %vm724, %v717, %v721
  %v726 = vand.u32 2147483647, %v716
  %vm727 = vcmp.eq.f32.partialorder %v726, 8.507059e+37
  %v728 = vand.u32 %v716, 2147483648
  %v729 = vor.u32 1.1754944e-38, %v728
  %v730 = vsel %vm727, %v729, %v725
  %v731 = vmul.f32 1.0, %v730
  %v732 = vmul.f32 %v731, 2.0
  %v733 = vsub.f32 %v732, 1.0
  %v734 = vmul.f32 %v731, %v655
  %736 = vrot.lane.b32.xlu0 %v733, 64
  %v737 = vpop.permute.xlu0 %736
  %v739 = vmul.f32 %v731, %v737
  %741 = vrot.lane.b32.xlu0 %v739, 32
  %v742 = vpop.permute.xlu0 %741
  %v744 = vadd.f32 %v734, %v742
  %v745 = vtanh.pop %v744
  %747 = vrot.lane.b32.xlu0 %v745, 64
  %v748 = vpop.permute.xlu0 %747
  %v750 = vmul.f32 %v731, %v748
  %v751 = vld [vmem:[%s3] sm:$0xff]
  %v752 = vld [vmem:[%s3 + $0x8] sm:$0xff]
  %v753 = vld [vmem:[%s3 + $0x10] sm:$0xff]
  %v754 = vld [vmem:[%s3 + $0x18] sm:$0xff]
  %v755 = vld [vmem:[%s4] sm:$0x1]
  %v757 = vperm.slane %v755, 0
  %760 = vrot.lane.b32.xlu0 %v750, 32
  %v761 = vpop.permute.xlu0 %760
  %v762 = vsel %vm50, %v761, 0
  %764 = vmatpush.msra.mxu0 0.0
  %765 = vmatpush.msra.mxu0 0.0
  %766 = vmatpush.msra.mxu0 0.0
  %767 = vmatpush.msra.mxu0 0.0
  %768 = vmatpush.msra.mxu0 0.0
  %769 = vmatpush.msra.mxu0 0.0
  %770 = vmatpush.msra.mxu0 0.0
  %771 = vmatpush.msra.mxu0 0.0
  %772 = vmatpush.msra.mxu0 0.0
  %773 = vmatpush.msra.mxu0 0.0
  %774 = vmatpush.msra.mxu0 0.0
  %775 = vmatpush.msra.mxu0 0.0
  %776 = vmatpush.msra.mxu0 %v754
  %777 = vmatpush.msra.mxu0 %v753
  %778 = vmatpush.msra.mxu0 %v752
  %779 = vmatpush.msra.mxu0 %v751
  %780 = vmatmul.f32.gmra.mxu0 %v762
  %v781 = vpop.f32.mrf.mxu0
  %v782 = vadd.f32 %v757, %v781
  %783 = vdwg.mxu0
  %784 = vst [vmem:[%s5] sm:$0xff] %v782
  // Predicated region
  $region22: #{_lambda_.1} parent=0 // pred_check
    _
  $region23: #{_lambda_.1} parent=0 // pred_check_branch
    %786 = sbr.rel (0) target = $region25
  $region24: #{_lambda_.1} parent=0 // pred_region
    _
  $region25: #{_lambda_.1} parent=0 // pred_fallthru
    _
  // Predicated region
  $region26: #{_lambda_.1} parent=0 // pred_check
    _
  $region27: #{_lambda_.1} parent=0 // pred_check_branch
    %788 = sbr.rel (0) target = $region29
  $region28: #{_lambda_.1} parent=0 // pred_region
    _
  $region29: #{_lambda_.1} parent=0 // pred_fallthru
    _

</llo_original>
